<compile_context>
chip_gen: v5e
topology: v5e:2x2
jax: 0.10.0
libtpu: 0.0.40
codegen_flags: <defaults>
</compile_context>

<pallas_src>
import functools

import jax
import jax.numpy as jnp
from jax.experimental import pallas as pl
from jax.experimental.pallas import tpu as pltpu


def _round_up(x, m):
    return (x + m - 1) // m * m


def _causal_dwconv_kernel(x_ref, w_ref, b_ref, o_ref, carry_ref, *, TL, K):
    # x_ref:     (1, TL, TD)  input block (input dtype)
    # w_ref:     (K, TD)      depthwise taps: tap index on sublanes, channels on lanes
    # b_ref:     (1, TD)      bias
    # o_ref:     (1, TL, TD)  output block
    # carry_ref: (K-1, TD)    fp32 halo: last K-1 input rows of the previous time tile
    #
    # NOTE: halo correctness requires the time axis to be the INNERMOST grid axis
    # and marked "arbitrary" (sequential): every (batch, channel-tile) pair then
    # runs its full time loop contiguously on one core and lt == 0 re-zeroes the
    # carry at the start of each loop. Do not reorder the grid.
    lt = pl.program_id(2)

    @pl.when(lt == 0)
    def _():
        carry_ref[...] = jnp.zeros_like(carry_ref)

    # One fp32 cast per tile (not per tap); weights / bias hoisted out of loops.
    x = x_ref[0].astype(jnp.float32)            # (TL, TD)
    w = w_ref[...].astype(jnp.float32)          # (K, TD)
    b = b_ref[...].astype(jnp.float32)          # (1, TD)
    carry = carry_ref[...]                      # (K-1, TD), already fp32

    # Main path: tap K-1 uses x unshifted (pure VPU); each remaining tap is a
    # sublane roll (XLU slot -> overlaps the VALU multiply-adds). Rows [0, K-1)
    # receive wrapped-around garbage and are recomputed exactly below.
    acc = x * w[K - 1:K, :]
    for k in range(K - 1):
        j = K - 1 - k                           # lookback distance of tap k
        acc = acc + pltpu.roll(x, j, 0) * w[k:k + 1, :]

    # Single aligned full-tile store; bias added once here.
    o_ref[0] = (acc + b).astype(o_ref.dtype)

    # Exact first K-1 rows from the tiny (2K-2, TD) context [carry ; x[:K-1]].
    head = jnp.concatenate([carry, x[:K - 1, :]], axis=0)     # (2K-2, TD)
    patch = head[0:K - 1, :] * w[0:1, :]
    for k in range(1, K):
        patch = patch + head[k:k + K - 1, :] * w[k:k + 1, :]
    o_ref[0, 0:K - 1, :] = (patch + b).astype(o_ref.dtype)    # tiny masked store

    # Carry the last K-1 input rows (already fp32) into the next time tile.
    carry_ref[...] = x[TL - (K - 1):, :]


def local_conv(x, weight, bias, kernel_size, *, time_tile=1024, chan_tile=512,
               donate_input=False):
    """Depthwise causal conv (Mamba LocalConv).

    x: (B, L, D); weight: (D, K) depthwise taps (torch conv1d weight squeezed);
    bias: (D,). Returns (B, L, D), identical to the PyTorch forward.
    """
    B, L, D = x.shape
    K = kernel_size
    assert K >= 2, "kernel_size must be >= 2 (Mamba uses 4)"
    itemsize = jnp.dtype(x.dtype).itemsize

    # Lane-dense channel tiles (multiple of 128). TD == D_pad when D fits a
    # single tile (fully contiguous DMA rows); otherwise TD >= chan_tile
    # (default 512 -> >= 2 KiB contiguous per strided-DMA row chunk at fp32).
    TD = min(_round_up(chan_tile, 128), _round_up(D, 128))
    # Packing-aware time tiles: 8 rows for 4-byte dtypes, 16 for bf16, 32 for int8.
    sub = max(8, 32 // itemsize)
    TL = min(_round_up(time_tile, sub), _round_up(L, sub))
    assert TL >= K - 1, "time tile must cover the K-1 halo"

    D_pad = _round_up(D, TD)
    L_pad = _round_up(L, TL)

    # v7x megacore: guarantee >= 2 blocks on a "parallel" grid axis so both
    # TensorCores get work (no-op on single-TC v5e/v6e; only fires when B == 1
    # and all channels fit one tile, and keeps halves 128-aligned).
    if B * (D_pad // TD) < 2 and TD % 256 == 0:
        TD //= 2

    # Only tile-unaligned (toy) shapes pay for this pad; production Mamba shapes
    # (D multiple of 128, L multiple of 8) pass straight through.
    if (D_pad, L_pad) != (D, L):
        x_in = jnp.pad(x, ((0, 0), (0, L_pad - L), (0, D_pad - D)))
        w_in = jnp.pad(weight, ((0, D_pad - D), (0, 0)))
        b_in = jnp.pad(bias, ((0, D_pad - D),))
    else:
        x_in, w_in, b_in = x, weight, bias

    w_kd = w_in.T                   # (K, D_pad): tap index first, channels on lanes
    b_1d = b_in[None, :]            # (1, D_pad)

    # VMEM budget: 2x double-buffered in + 2x out + tiny weight/bias/carry.
    blk_bytes = TL * TD * itemsize
    est_vmem = 4 * blk_bytes + 4 * (K + 1) * TD * itemsize + (K - 1) * TD * 4
    vmem_limit = None
    if est_vmem > 12 * 1024 * 1024:
        # Big-tile configs: raise the scoped-VMEM ceiling explicitly. Keep the
        # total well under v7x's 64 MiB physical VMEM when growing tiles further.
        vmem_limit = int(est_vmem) + (4 << 20)

    grid = (B, D_pad // TD, L_pad // TL)
    kernel = functools.partial(_causal_dwconv_kernel, TL=TL, K=K)

    cost = pl.CostEstimate(
        flops=2 * K * B * L * D,
        transcendentals=0,
        bytes_accessed=2 * B * L * D * itemsize,
    )

    y = pl.pallas_call(
        kernel,
        out_shape=jax.ShapeDtypeStruct((B, L_pad, D_pad), x.dtype),
        grid_spec=pltpu.PrefetchScalarGridSpec(
            num_scalar_prefetch=0,
            grid=grid,
            in_specs=[
                pl.BlockSpec((1, TL, TD), lambda b, d, l: (b, l, d)),
                pl.BlockSpec((K, TD), lambda b, d, l: (0, d)),
                pl.BlockSpec((1, TD), lambda b, d, l: (0, d)),
            ],
            out_specs=pl.BlockSpec((1, TL, TD), lambda b, d, l: (b, l, d)),
            scratch_shapes=[pltpu.VMEM((K - 1, TD), jnp.float32)],  # fp32 halo carry
        ),
        compiler_params=pltpu.CompilerParams(
            # Batch / channel tiles are independent (shardable across v7x's 2 TCs);
            # the time axis carries the K-1 halo -> must stay sequential & innermost.
            dimension_semantics=("parallel", "parallel", "arbitrary"),
            vmem_limit_bytes=vmem_limit,
        ),
        cost_estimate=cost,
        input_output_aliases={0: 0} if donate_input else {},
    )(x_in, w_kd, b_1d)

    if (D_pad, L_pad) != (D, L):
        y = y[:, :L, :D]
    return y


def _reference(x, weight, bias, K):
    """Plain-JAX reference mirroring the PyTorch forward exactly."""
    B, L, D = x.shape
    x_pad = jnp.pad(x, ((0, 0), (K - 1, 0), (0, 0)))          # (B, L+K-1, D)
    out = jnp.zeros((B, L, D), jnp.float32) + bias[None, None, :]
    for k in range(K):
        out = out + x_pad[:, k:k + L, :] * weight[None, None, :, k]
    return out.astype(x.dtype)


if __name__ == "__main__":
    key = jax.random.PRNGKey(0)

    # --- Small demo shapes matching the module (batch=2, seq=8, d_model=32, K=4) ---
    B, L, D, K = 2, 8, 32, 4
    kx, kw, kb = jax.random.split(key, 3)
    x = jax.random.normal(kx, (B, L, D), dtype=jnp.float32)
    bound = 1.0 / (K ** 0.5)
    weight = jax.random.uniform(kw, (D, K), minval=-bound, maxval=bound, dtype=jnp.float32)
    bias = jax.random.uniform(kb, (D,), minval=-bound, maxval=bound, dtype=jnp.float32)

    y = jax.block_until_ready(local_conv(x, weight, bias, K))
    y_ref = _reference(x, weight, bias, K)
    assert y.shape == (B, L, D)
    assert jnp.allclose(y, y_ref, atol=1e-5, rtol=1e-5), "mismatch vs reference (demo shapes)"

    # --- Multi-tile correctness check: halo carry across 4 time tiles + D tiling ---
    # (Deliberately tiny tiles to exercise the carry path; not a perf configuration.)
    B2, L2, D2 = 2, 64, 256
    kx2, kw2, kb2 = jax.random.split(jax.random.PRNGKey(1), 3)
    x2 = jax.random.normal(kx2, (B2, L2, D2), dtype=jnp.float32)
    w2 = jax.random.uniform(kw2, (D2, K), minval=-bound, maxval=bound, dtype=jnp.float32)
    b2 = jax.random.uniform(kb2, (D2,), minval=-bound, maxval=bound, dtype=jnp.float32)

    y2 = jax.block_until_ready(
        local_conv(x2, w2, b2, K, time_tile=16, chan_tile=128))
    y2_ref = _reference(x2, w2, b2, K)
    assert jnp.allclose(y2, y2_ref, atol=1e-5, rtol=1e-5), "mismatch vs reference (tiled shapes)"

    print("KERNEL_OK")
</pallas_src>

<mosaic_0001>
module attributes {stable_mosaic.version = 11 : i64} {
  func.func @_causal_dwconv_kernel(%arg0: i32, %arg1: i32, %arg2: i32, %arg3: memref<1x8x128xf32, #tpu.memory_space<vmem>>, %arg4: memref<4x128xf32, #tpu.memory_space<vmem>>, %arg5: memref<1x128xf32, #tpu.memory_space<vmem>>, %arg6: memref<1x8x128xf32, #tpu.memory_space<vmem>>, %arg7: memref<3x128xf32, #tpu.memory_space<vmem>>) attributes {dimension_semantics = [#tpu.dimension_semantics<parallel>, #tpu.dimension_semantics<parallel>, #tpu.dimension_semantics<arbitrary>], iteration_bounds = array<i64: 2, 1, 1>, scalar_prefetch = 0 : i64, scratch_operands = 1 : i64, tpu.core_type = #tpu.core_type<tc>, window_params = [{transform_indices = @transform_0, window_bounds = array<i64: 1, 8, 128>}, {transform_indices = @transform_1, window_bounds = array<i64: 4, 128>}, {transform_indices = @transform_2, window_bounds = array<i64: 1, 128>}, {transform_indices = @transform_3, window_bounds = array<i64: 1, 8, 128>}]} {
    %c0_i32 = arith.constant 0 : i32
    %0 = arith.cmpi eq, %arg2, %c0_i32 : i32
    %1 = arith.extui %0 : i1 to i32
    %c0_i32_0 = arith.constant 0 : i32
    %2 = arith.cmpi ne, %1, %c0_i32_0 : i32
    scf.if %2 {
      %cst = arith.constant 0.000000e+00 : f32
      %59 = vector.broadcast %cst : f32 to vector<3x128xf32>
      %c0_17 = arith.constant 0 : index
      %c0_18 = arith.constant 0 : index
      %60 = vector.load %arg7[%c0_17, %c0_18] : memref<3x128xf32, #tpu.memory_space<vmem>>, vector<3x128xf32>
      tpu.vector_store %arg7[%c0_17, %c0_18], %59 {strides = array<i32>} : memref<3x128xf32, #tpu.memory_space<vmem>>, vector<3x128xf32>,
    } else {
    }
    %c0 = arith.constant 0 : index
    %c0_1 = arith.constant 0 : index
    %c0_2 = arith.constant 0 : index
    %3 = vector.load %arg3[%c0, %c0_1, %c0_2] : memref<1x8x128xf32, #tpu.memory_space<vmem>>, vector<1x8x128xf32>
    %4 = vector.shape_cast %3 : vector<1x8x128xf32> to vector<8x128xf32>
    %c0_3 = arith.constant 0 : index
    %c0_4 = arith.constant 0 : index
    %5 = vector.load %arg4[%c0_3, %c0_4] : memref<4x128xf32, #tpu.memory_space<vmem>>, vector<4x128xf32>
    %c0_5 = arith.constant 0 : index
    %c0_6 = arith.constant 0 : index
    %6 = vector.load %arg5[%c0_5, %c0_6] : memref<1x128xf32, #tpu.memory_space<vmem>>, vector<1x128xf32>
    %c0_7 = arith.constant 0 : index
    %c0_8 = arith.constant 0 : index
    %7 = vector.load %arg7[%c0_7, %c0_8] : memref<3x128xf32, #tpu.memory_space<vmem>>, vector<3x128xf32>
    %8 = vector.extract_strided_slice %5 {offsets = [3, 0], sizes = [1, 128], strides = [1, 1]} : vector<4x128xf32> to vector<1x128xf32>
    %9 = vector.broadcast %8 : vector<1x128xf32> to vector<8x128xf32>
    %10 = arith.mulf %4, %9 : vector<8x128xf32>
    %c3_i32 = arith.constant 3 : i32
    %11 = tpu.dynamic_rotate %4 by %c3_i32 dim 0 : vector<8x128xf32>, i32 -> vector<8x128xf32>
    %12 = vector.extract_strided_slice %5 {offsets = [0, 0], sizes = [1, 128], strides = [1, 1]} : vector<4x128xf32> to vector<1x128xf32>
    %13 = vector.broadcast %12 : vector<1x128xf32> to vector<8x128xf32>
    %14 = arith.mulf %11, %13 : vector<8x128xf32>
    %15 = arith.addf %10, %14 : vector<8x128xf32>
    %c2_i32 = arith.constant 2 : i32
    %16 = tpu.dynamic_rotate %4 by %c2_i32 dim 0 : vector<8x128xf32>, i32 -> vector<8x128xf32>
    %17 = vector.extract_strided_slice %5 {offsets = [1, 0], sizes = [1, 128], strides = [1, 1]} : vector<4x128xf32> to vector<1x128xf32>
    %18 = vector.broadcast %17 : vector<1x128xf32> to vector<8x128xf32>
    %19 = arith.mulf %16, %18 : vector<8x128xf32>
    %20 = arith.addf %15, %19 : vector<8x128xf32>
    %c1_i32 = arith.constant 1 : i32
    %21 = tpu.dynamic_rotate %4 by %c1_i32 dim 0 : vector<8x128xf32>, i32 -> vector<8x128xf32>
    %22 = vector.extract_strided_slice %5 {offsets = [2, 0], sizes = [1, 128], strides = [1, 1]} : vector<4x128xf32> to vector<1x128xf32>
    %23 = vector.broadcast %22 : vector<1x128xf32> to vector<8x128xf32>
    %24 = arith.mulf %21, %23 : vector<8x128xf32>
    %25 = arith.addf %20, %24 : vector<8x128xf32>
    %26 = vector.broadcast %6 : vector<1x128xf32> to vector<8x128xf32>
    %27 = arith.addf %25, %26 : vector<8x128xf32>
    %c0_9 = arith.constant 0 : index
    %c0_10 = arith.constant 0 : index
    %c0_11 = arith.constant 0 : index
    %28 = vector.load %arg6[%c0_9, %c0_10, %c0_11] : memref<1x8x128xf32, #tpu.memory_space<vmem>>, vector<1x8x128xf32>
    %29 = vector.shape_cast %28 : vector<1x8x128xf32> to vector<8x128xf32>
    %30 = vector.shape_cast %27 : vector<8x128xf32> to vector<1x8x128xf32>
    tpu.vector_store %arg6[%c0_9, %c0_10, %c0_11], %30 {strides = array<i32>} : memref<1x8x128xf32, #tpu.memory_space<vmem>>, vector<1x8x128xf32>,
    %31 = vector.extract_strided_slice %4 {offsets = [0, 0], sizes = [3, 128], strides = [1, 1]} : vector<8x128xf32> to vector<3x128xf32>
    %32 = tpu.concatenate %7, %31 in 0 : vector<3x128xf32>, vector<3x128xf32> -> vector<6x128xf32>
    %33 = vector.extract_strided_slice %32 {offsets = [0, 0], sizes = [3, 128], strides = [1, 1]} : vector<6x128xf32> to vector<3x128xf32>
    %34 = vector.extract_strided_slice %5 {offsets = [0, 0], sizes = [1, 128], strides = [1, 1]} : vector<4x128xf32> to vector<1x128xf32>
    %35 = vector.broadcast %34 : vector<1x128xf32> to vector<3x128xf32>
    %36 = arith.mulf %33, %35 : vector<3x128xf32>
    %37 = vector.extract_strided_slice %32 {offsets = [1, 0], sizes = [3, 128], strides = [1, 1]} : vector<6x128xf32> to vector<3x128xf32>
    %38 = vector.extract_strided_slice %5 {offsets = [1, 0], sizes = [1, 128], strides = [1, 1]} : vector<4x128xf32> to vector<1x128xf32>
    %39 = vector.broadcast %38 : vector<1x128xf32> to vector<3x128xf32>
    %40 = arith.mulf %37, %39 : vector<3x128xf32>
    %41 = arith.addf %36, %40 : vector<3x128xf32>
    %42 = vector.extract_strided_slice %32 {offsets = [2, 0], sizes = [3, 128], strides = [1, 1]} : vector<6x128xf32> to vector<3x128xf32>
    %43 = vector.extract_strided_slice %5 {offsets = [2, 0], sizes = [1, 128], strides = [1, 1]} : vector<4x128xf32> to vector<1x128xf32>
    %44 = vector.broadcast %43 : vector<1x128xf32> to vector<3x128xf32>
    %45 = arith.mulf %42, %44 : vector<3x128xf32>
    %46 = arith.addf %41, %45 : vector<3x128xf32>
    %47 = vector.extract_strided_slice %32 {offsets = [3, 0], sizes = [3, 128], strides = [1, 1]} : vector<6x128xf32> to vector<3x128xf32>
    %48 = vector.extract_strided_slice %5 {offsets = [3, 0], sizes = [1, 128], strides = [1, 1]} : vector<4x128xf32> to vector<1x128xf32>
    %49 = vector.broadcast %48 : vector<1x128xf32> to vector<3x128xf32>
    %50 = arith.mulf %47, %49 : vector<3x128xf32>
    %51 = arith.addf %46, %50 : vector<3x128xf32>
    %52 = vector.broadcast %6 : vector<1x128xf32> to vector<3x128xf32>
    %53 = arith.addf %51, %52 : vector<3x128xf32>
    %c0_12 = arith.constant 0 : index
    %c0_13 = arith.constant 0 : index
    %c0_14 = arith.constant 0 : index
    %54 = vector.load %arg6[%c0_12, %c0_13, %c0_14] : memref<1x8x128xf32, #tpu.memory_space<vmem>>, vector<1x3x128xf32>
    %55 = vector.shape_cast %54 : vector<1x3x128xf32> to vector<3x128xf32>
    %56 = vector.shape_cast %53 : vector<3x128xf32> to vector<1x3x128xf32>
    tpu.vector_store %arg6[%c0_12, %c0_13, %c0_14], %56 {strides = array<i32>} : memref<1x8x128xf32, #tpu.memory_space<vmem>>, vector<1x3x128xf32>,
    %57 = vector.extract_strided_slice %4 {offsets = [5, 0], sizes = [3, 128], strides = [1, 1]} : vector<8x128xf32> to vector<3x128xf32>
    %c0_15 = arith.constant 0 : index
    %c0_16 = arith.constant 0 : index
    %58 = vector.load %arg7[%c0_15, %c0_16] : memref<3x128xf32, #tpu.memory_space<vmem>>, vector<3x128xf32>
    tpu.vector_store %arg7[%c0_15, %c0_16], %57 {strides = array<i32>} : memref<3x128xf32, #tpu.memory_space<vmem>>, vector<3x128xf32>,
    return
  }
  func.func @transform_0(%arg0: i32, %arg1: i32, %arg2: i32) -> (i32, i32, i32) {
    %c0_i32 = arith.constant 0 : i32
    return %arg0, %arg2, %arg1 : i32, i32, i32
  }
  func.func @transform_1(%arg0: i32, %arg1: i32, %arg2: i32) -> (i32, i32) {
    %c0_i32 = arith.constant 0 : i32
    %c0_i32_0 = arith.constant 0 : i32
    return %c0_i32, %arg1 : i32, i32
  }
  func.func @transform_2(%arg0: i32, %arg1: i32, %arg2: i32) -> (i32, i32) {
    %c0_i32 = arith.constant 0 : i32
    %c0_i32_0 = arith.constant 0 : i32
    return %c0_i32, %arg1 : i32, i32
  }
  func.func @transform_3(%arg0: i32, %arg1: i32, %arg2: i32) -> (i32, i32, i32) {
    %c0_i32 = arith.constant 0 : i32
    return %arg0, %arg2, %arg1 : i32, i32, i32
  }
}

</mosaic_0001>

<llo_original>
// kernel: tpu_custom_call.1
$region0: #{tpu_custom_call.1}
  #allocation0 [shape = 'u32[]', space=smem, size = 0x4, offset = 0x4, fixed_abs, tag = 'smem constant byte address 0x4 - core index']
  #allocation1 [shape = 'u32[72,128]{1,0:T(1,128)}', space=vmem, size = 0x9000, scoped, tag = 'internal scratch']
  #allocation2 [shape = 'f32[3,128]{1,0:T(4,128)}', space=vmem, size = 0x800, scoped, tag = 'scratch operand']
  %s0 = inlined_call_operand.hbm [shape: f32[2,8,128], index: 0, kind: input, shape index: {}]
  %s1 = inlined_call_operand.hbm [shape: f32[4,128], index: 1, kind: input, shape index: {}]
  %s2 = inlined_call_operand.vmem [shape: f32[1,128], index: 2, kind: input, shape index: {}]
  %s3 = inlined_call_operand.hbm [shape: f32[2,8,128], index: 3, kind: output, shape index: {}]
  %s4 = sld [smem:[#allocation0]]
  $region57: #{tpu_custom_call.1} parent=0
    _
  %s6 = ssub.s32 1, %s4
  %s7 = scalar_select 0, %s6, %s4
  $region1: #{tpu_custom_call.1} parent=0
    #allocation3 [shape = 'u8[8192]{0}', space=vmem, size = 0x2000, scoped, tag = 'input window, operand 0']
    #allocation4 [shape = 's32[2]{0}', space=sflag, size = 0x8, scoped, tag = 'scoped memory for tpu_custom_call.1']
    #allocation5 [shape = 's32[2]{0}', space=sflag, size = 0x8, scoped, tag = 'scoped memory for tpu_custom_call.1']
    #allocation6 [shape = 'u8[2048]{0}', space=vmem, size = 0x800, scoped, tag = 'input window, operand 1, single buffered']
    #allocation7 [shape = 's32[1]{0}', space=sflag, size = 0x4, scoped, tag = 'scoped memory for tpu_custom_call.1']
    #allocation8 [shape = 'u8[8192]{0}', space=vmem, size = 0x2000, scoped, tag = 'output window, operand 0']
    %8 = vsyncpa [#allocation4], 0
    %s9 = scalar_lea.sflag [#allocation4], 1
    %10 = vsyncpa %s9, 0
    %11 = vsyncpa [#allocation7], 0
    %12 = vsyncpa [#allocation5], 0
    %s13 = scalar_lea.sflag [#allocation5], 1
    %14 = vsyncpa %s13, 0
    loop: start=0, step=1, limit=4
    $region2: #{tpu_custom_call.1} parent=1 // loop_pre_header
      _
    $region3: #{tpu_custom_call.1} parent=1 // loop_header
      %s16 = sphi 0, %s20
      %p17 = scmp.ge.s32.totalorder %s16, 4
      %s23 = sphi 0, %s42
      %s24 = sphi 0, %s38
      %s25 = sphi 0, %s34
      %s26 = sphi 0, %s23
      %s27 = sphi 0, %s24
      %s28 = sphi 0, %s25
      %s29 = sphi 0, %s26
      %s30 = sphi 0, %s27
      %s31 = sphi 0, %s28
      %s49 = sphi 0, %s51
      %s52 = sphi 0, %s49
      %s53 = sphi 0, %s52
      %s69 = sphi 0, %s53
      %s75 = sphi 0, %s77
      %s78 = sphi 0, %s75
      %s79 = sphi 0, %s78
      %s95 = sphi 0, %s79
      %s101 = sphi 0, %s103
      %s104 = sphi 0, %s101
      %s105 = sphi 0, %s104
      %s121 = sphi 0, %s105
      %s131 = sphi 0, %s133
      %s134 = sphi 0, %s131
      %s135 = sphi 0, %s134
      %s151 = sphi 0, %s135
    $region4: #{tpu_custom_call.1} parent=1 // loop_header_branch
      %19 = sbr.rel (%p17) target = $region8
    $region5: #{tpu_custom_call.1} parent=1 // loop_body
      %s21 = ssub.s32 %s16, 1
      %s22 = ssub.s32 %s16, 2
      %s32 = sadd.s32 1, %s25
      %p33 = scmp.ge.s32.totalorder %s32, 1
      %s34 = scalar_select %p33, 0, %s32
      %s35 = sadd.s32 1, %s24
      %s36 = scalar_select %p33, %s35, %s24
      %p37 = scmp.ge.s32.totalorder %s36, 1
      %s38 = scalar_select %p37, 0, %s36
      %s39 = sadd.s32 1, %s23
      %s40 = scalar_select %p37, %s39, %s23
      %p41 = scmp.ge.s32.totalorder %s40, 2
      %s42 = scalar_select %p41, 0, %s40
      %s43 = ssub.s32 %s23, %s42
      %s44 = ssub.s32 %s25, %s34
      %s45 = sor.u32 %s43, %s44
      %s46 = ssub.s32 %s24, %s38
      %s47 = sor.u32 %s45, %s46
      %p48 = scmp.eq.s32.totalorder %s47, 0
      %s50 = sadd.s32 %s49, 1
      %s51 = scalar_select %p48, %s49, %s50
      %p54 = pneg %p48
      %p55 = scmp.eq.s32.totalorder %s16, 1
      %p56 = por %p54, %p55
      %p57 = scmp.ne.s32.totalorder %s49, %s52
      %p58 = scmp.eq.s32.totalorder %s16, 0
      %p59 = por %p57, %p58
      %p60 = scmp.ne.s32.totalorder %s49, %s52
      %p61 = scmp.eq.s32.totalorder %s21, 1
      %p62 = por %p60, %p61
      %p63 = scmp.ne.s32.totalorder %s52, %s53
      %p64 = scmp.eq.s32.totalorder %s21, 0
      %p65 = por %p63, %p64
      %p66 = scmp.ne.s32.totalorder %s52, %s53
      %p67 = scmp.eq.s32.totalorder %s22, 1
      %p68 = por %p66, %p67
      %p70 = scmp.ne.s32.totalorder %s53, %s69
      %p71 = scmp.eq.s32.totalorder %s22, 0
      %p72 = por %p70, %p71
      %s73 = ssub.s32 %s24, %s38
      %p74 = scmp.eq.s32.totalorder %s73, 0
      %s76 = sadd.s32 %s75, 1
      %s77 = scalar_select %p74, %s75, %s76
      %p80 = pneg %p74
      %p81 = scmp.eq.s32.totalorder %s16, 1
      %p82 = por %p80, %p81
      %p83 = scmp.ne.s32.totalorder %s75, %s78
      %p84 = scmp.eq.s32.totalorder %s16, 0
      %p85 = por %p83, %p84
      %p86 = scmp.ne.s32.totalorder %s75, %s78
      %p87 = scmp.eq.s32.totalorder %s21, 1
      %p88 = por %p86, %p87
      %p89 = scmp.ne.s32.totalorder %s78, %s79
      %p90 = scmp.eq.s32.totalorder %s21, 0
      %p91 = por %p89, %p90
      %p92 = scmp.ne.s32.totalorder %s78, %s79
      %p93 = scmp.eq.s32.totalorder %s22, 1
      %p94 = por %p92, %p93
      %p96 = scmp.ne.s32.totalorder %s79, %s95
      %p97 = scmp.eq.s32.totalorder %s22, 0
      %p98 = por %p96, %p97
      %s99 = ssub.s32 %s24, %s38
      %p100 = scmp.eq.s32.totalorder %s99, 0
      %s102 = sadd.s32 %s101, 1
      %s103 = scalar_select %p100, %s101, %s102
      %p106 = pneg %p100
      %p107 = scmp.eq.s32.totalorder %s16, 1
      %p108 = por %p106, %p107
      %p109 = scmp.ne.s32.totalorder %s101, %s104
      %p110 = scmp.eq.s32.totalorder %s16, 0
      %p111 = por %p109, %p110
      %p112 = scmp.ne.s32.totalorder %s101, %s104
      %p113 = scmp.eq.s32.totalorder %s21, 1
      %p114 = por %p112, %p113
      %p115 = scmp.ne.s32.totalorder %s104, %s105
      %p116 = scmp.eq.s32.totalorder %s21, 0
      %p117 = por %p115, %p116
      %p118 = scmp.ne.s32.totalorder %s104, %s105
      %p119 = scmp.eq.s32.totalorder %s22, 1
      %p120 = por %p118, %p119
      %p122 = scmp.ne.s32.totalorder %s105, %s121
      %p123 = scmp.eq.s32.totalorder %s22, 0
      %p124 = por %p122, %p123
      %s125 = ssub.s32 %s23, %s42
      %s126 = ssub.s32 %s25, %s34
      %s127 = sor.u32 %s125, %s126
      %s128 = ssub.s32 %s24, %s38
      %s129 = sor.u32 %s127, %s128
      %p130 = scmp.eq.s32.totalorder %s129, 0
      %s132 = sadd.s32 %s131, 1
      %s133 = scalar_select %p130, %s131, %s132
      %p136 = pneg %p130
      %p137 = scmp.eq.s32.totalorder %s16, 1
      %p138 = por %p136, %p137
      %p139 = scmp.ne.s32.totalorder %s131, %s134
      %p140 = scmp.eq.s32.totalorder %s16, 0
      %p141 = por %p139, %p140
      %p142 = scmp.ne.s32.totalorder %s131, %s134
      %p143 = scmp.eq.s32.totalorder %s21, 1
      %p144 = por %p142, %p143
      %p145 = scmp.ne.s32.totalorder %s134, %s135
      %p146 = scmp.eq.s32.totalorder %s21, 0
      %p147 = por %p145, %p146
      %p148 = scmp.ne.s32.totalorder %s134, %s135
      %p149 = scmp.eq.s32.totalorder %s22, 1
      %p150 = por %p148, %p149
      %p152 = scmp.ne.s32.totalorder %s135, %s151
      %p153 = scmp.eq.s32.totalorder %s22, 0
      %p154 = por %p152, %p153
      %p155 = scmp.le.s32.totalorder 1, %s16
      %p156 = scmp.lt.s32.totalorder %s16, 3
      %p157 = pnand %p155, %p156
      %p158 = pneg %p157
      // Predicated region
      $region9: #{tpu_custom_call.1} parent=5 // pred_check
        _
      $region10: #{tpu_custom_call.1} parent=5 // pred_check_branch
        %160 = sbr.rel (%p157) target = $region12
      $region11: #{tpu_custom_call.1} parent=5 // pred_region
        %s161 = ssub.s32 %s16, 1
        // Predicated region
        $region13: #{tpu_custom_call.1} parent=11 // pred_check
          %p162 = pneg %p91
        $region14: #{tpu_custom_call.1} parent=11 // pred_check_branch
          %164 = sbr.rel (%p162) target = $region16
        $region15: #{tpu_custom_call.1} parent=11 // pred_region
          %166 = vsyncadd [#allocation7], 0
          %s167 = smul.addr %s27, 4
          %s168 = scalar_lea.hbm %s1, %s167
          %s170 = sshll.u32 %s168, 4
          %s171 = int_to_ptr.hbm [resolvable:$true] %s170
          %s172 = sshll.u32 [#allocation6], 4
          %s173 = int_to_ptr.vmem [resolvable:$true] %s172
          %175 = dma.hbm_to_vmem [thread:$0]  %s171, 64, %s173, [#allocation7]
        $region16: #{tpu_custom_call.1} parent=11 // pred_fallthru
          _
        // Predicated region
        $region17: #{tpu_custom_call.1} parent=11 // pred_check
          %p176 = pneg %p117
        $region18: #{tpu_custom_call.1} parent=11 // pred_check_branch
          %178 = sbr.rel (%p176) target = $region20
        $region19: #{tpu_custom_call.1} parent=11 // pred_region
          %p179 = scmp.lt.s32.totalorder %s27, 0
          %s180 = scalar_select %p179, %s27, 0
          %s181 = scalar_lea.vmem %s2, %s180
        $region20: #{tpu_custom_call.1} parent=11 // pred_fallthru
          _
      $region12: #{tpu_custom_call.1} parent=5 // pred_fallthru
        _
      %p182 = scmp.lt.s32.totalorder %s16, 2
      // Predicated region
      $region21: #{tpu_custom_call.1} parent=5 // pred_check
        %p183 = pneg %p182
      $region22: #{tpu_custom_call.1} parent=5 // pred_check_branch
        %185 = sbr.rel (%p183) target = $region24
      $region23: #{tpu_custom_call.1} parent=5 // pred_region
        // Predicated region
        $region25: #{tpu_custom_call.1} parent=23 // pred_check
          %p186 = pneg %p59
        $region26: #{tpu_custom_call.1} parent=23 // pred_check_branch
          %188 = sbr.rel (%p186) target = $region28
        $region27: #{tpu_custom_call.1} parent=23 // pred_region
          %s189 = sand.u32 %s49, 1
          %s190 = scalar_lea.sflag [#allocation4], %s189
          %s191 = sand.u32 %s49, 1
          %s192 = smul.addr %s191, 8
          %s193 = scalar_lea.vmem [#allocation3], %s192
          %195 = vsyncadd %s190, 0
          %s196 = sadd.s32 %s24, %s25
          %s197 = sadd.s32 %s196, %s23
          %s198 = smul.addr %s197, 8
          %s199 = scalar_lea.hbm %s0, %s198
          %s201 = sshll.u32 %s199, 4
          %s202 = int_to_ptr.hbm [resolvable:$true] %s201
          %s203 = sshll.u32 %s193, 4
          %s204 = int_to_ptr.vmem [resolvable:$true] %s203
          %206 = dma.hbm_to_vmem [thread:$0]  %s202, 128, %s204, %s190
        $region28: #{tpu_custom_call.1} parent=23 // pred_fallthru
          _
      $region24: #{tpu_custom_call.1} parent=5 // pred_fallthru
        _
      %p207 = scmp.le.s32.totalorder 1, %s16
      %p208 = scmp.lt.s32.totalorder %s16, 3
      %p209 = pnand %p207, %p208
      %p210 = pneg %p209
      // Predicated region
      $region29: #{tpu_custom_call.1} parent=5 // pred_check
        _
      $region30: #{tpu_custom_call.1} parent=5 // pred_check_branch
        %212 = sbr.rel (%p209) target = $region32
      $region31: #{tpu_custom_call.1} parent=5 // pred_region
        %s213 = ssub.s32 %s16, 1
        %s214 = sand.u32 %s52, 1
        %s215 = scalar_lea.sflag [#allocation4], %s214
        %s216 = sand.u32 %s52, 1
        %s217 = smul.addr %s216, 8
        %s218 = scalar_lea.vmem [#allocation3], %s217
        // Predicated region
        $region33: #{tpu_custom_call.1} parent=31 // pred_check
          %p219 = pneg %p65
        $region34: #{tpu_custom_call.1} parent=31 // pred_check_branch
          %221 = sbr.rel (%p219) target = $region36
        $region35: #{tpu_custom_call.1} parent=31 // pred_region
          %223 = dma.done %s215, 128
        $region36: #{tpu_custom_call.1} parent=31 // pred_fallthru
          _
        // Predicated region
        $region37: #{tpu_custom_call.1} parent=31 // pred_check
          %p224 = pneg %p91
        $region38: #{tpu_custom_call.1} parent=31 // pred_check_branch
          %226 = sbr.rel (%p224) target = $region40
        $region39: #{tpu_custom_call.1} parent=31 // pred_region
          %228 = dma.done [#allocation7], 64
        $region40: #{tpu_custom_call.1} parent=31 // pred_fallthru
          _
        %s229 = sand.u32 %s52, 1
        %s230 = scalar_lea.sflag [#allocation4], %s229
        %s231 = sand.u32 %s52, 1
        %s232 = smul.addr %s231, 8
        %s233 = scalar_lea.vmem [#allocation3], %s232
        %p234 = pneg %p65
        %p235 = pneg %p62
        %p236 = pneg %p91
        %p237 = pneg %p88
        %p238 = scmp.lt.s32.totalorder %s27, 0
        %s239 = scalar_select %p238, %s27, 0
        %s240 = scalar_lea.vmem %s2, %s239
        %p241 = pneg %p117
        %p242 = pneg %p114
        %p243 = pneg %p147
        %p244 = pneg %p144
        %s245 = sand.u32 %s134, 1
        %s246 = scalar_lea.sflag [#allocation5], %s245
        %s247 = sand.u32 %s134, 1
        %s248 = smul.addr %s247, 8
        %s249 = scalar_lea.vmem [#allocation8], %s248
        %p250 = scmp.lt.s32.totalorder %s27, 0
        %s251 = scalar_select %p250, %s27, 0
        %s252 = scalar_lea.vmem %s2, %s251
        %p253 = scmp.eq.s32.totalorder %s28, 0
        // Predicated region
        $region41: #{tpu_custom_call.1} parent=31 // pred_check
          %p254 = pneg %p253
        $region42: #{tpu_custom_call.1} parent=31 // pred_check_branch
          %256 = sbr.rel (%p254) target = $region44
        $region43: #{tpu_custom_call.1} parent=31 // pred_region
          %257 = vst [vmem:[#allocation2] sm:$0x7] 0.0
        $region44: #{tpu_custom_call.1} parent=31 // pred_fallthru
          _
        %v258 = vld [vmem:[%s218] sm:$0xff]
        %v259 = vld [vmem:[#allocation6] sm:$0xf]
        %v260 = vld [vmem:[%s252] sm:$0x1]
        %v261 = vld [vmem:[#allocation2] sm:$0x7]
        %v262 = vperm.slane %v259, 3
        %v263 = vmul.f32 %v258, %v262
        %v264 = vrot.slane %v258, 5
        %v265 = vperm.slane %v259, 0
        %v266 = vmul.f32 %v264, %v265
        %v267 = vadd.f32 %v263, %v266
        %v268 = vrot.slane %v258, 6
        %v269 = vperm.slane %v259, 1
        %v270 = vmul.f32 %v268, %v269
        %v271 = vadd.f32 %v267, %v270
        %v272 = vrot.slane %v258, 7
        %v273 = vperm.slane %v259, 2
        %v274 = vmul.f32 %v272, %v273
        %v275 = vadd.f32 %v271, %v274
        %v277 = vperm.slane %v260, 0
        %v279 = vadd.f32 %v275, %v277
        %280 = vst [vmem:[%s249] sm:$0xff] %v279
        %v282 = vrot.slane %v258, 5
        %vm284 = vcmask 1042432
        %v285 = vsel %vm284, %v261, %v282
        %v286 = vmul.f32 %v285, %v265
        %v287 = vmul.f32 %v285, %v269
        %v289 = vrot.slane %v287, 1
        %v291 = vadd.f32 %v286, %v289
        %v292 = vmul.f32 %v285, %v273
        %v294 = vrot.slane %v292, 2
        %v296 = vadd.f32 %v291, %v294
        %v297 = vmul.f32 %v285, %v262
        %v299 = vrot.slane %v297, 3
        %v301 = vadd.f32 %v296, %v299
        %v302 = vadd.f32 %v301, %v277
        %303 = vst [vmem:[%s249] sm:$0x7] %v302
        %304 = vst [vmem:[#allocation2 - $0x5] sm:$0xe0] %v258
        %s305 = sand.u32 %s134, 1
        %s306 = scalar_lea.sflag [#allocation5], %s305
        %s307 = sand.u32 %s134, 1
        %s308 = smul.addr %s307, 8
        %s309 = scalar_lea.vmem [#allocation8], %s308
        // Predicated region
        $region45: #{tpu_custom_call.1} parent=31 // pred_check
          %p310 = pneg %p144
        $region46: #{tpu_custom_call.1} parent=31 // pred_check_branch
          %312 = sbr.rel (%p310) target = $region48
        $region47: #{tpu_custom_call.1} parent=31 // pred_region
          %314 = vsyncadd %s306, 0
          %s315 = sadd.s32 %s27, %s28
          %s316 = sadd.s32 %s315, %s26
          %s317 = smul.addr %s316, 8
          %s318 = scalar_lea.hbm %s3, %s317
          %s320 = sshll.u32 %s309, 4
          %s321 = int_to_ptr.vmem [resolvable:$true] %s320
          %s322 = sshll.u32 %s318, 4
          %s323 = int_to_ptr.hbm [resolvable:$true] %s322
          %325 = dma.vmem_to_hbm [thread:$0]  %s321, 128, %s323, %s306
        $region48: #{tpu_custom_call.1} parent=31 // pred_fallthru
          _
      $region32: #{tpu_custom_call.1} parent=5 // pred_fallthru
        _
      %p326 = scmp.le.s32.totalorder 2, %s16
      // Predicated region
      $region49: #{tpu_custom_call.1} parent=5 // pred_check
        %p327 = pneg %p326
      $region50: #{tpu_custom_call.1} parent=5 // pred_check_branch
        %329 = sbr.rel (%p327) target = $region52
      $region51: #{tpu_custom_call.1} parent=5 // pred_region
        %s330 = ssub.s32 %s16, 2
        // Predicated region
        $region53: #{tpu_custom_call.1} parent=51 // pred_check
          %p331 = pneg %p150
        $region54: #{tpu_custom_call.1} parent=51 // pred_check_branch
          %333 = sbr.rel (%p331) target = $region56
        $region55: #{tpu_custom_call.1} parent=51 // pred_region
          %s334 = sand.u32 %s135, 1
          %s335 = scalar_lea.sflag [#allocation5], %s334
          %s336 = sand.u32 %s135, 1
          %s337 = smul.addr %s336, 8
          %s338 = scalar_lea.vmem [#allocation8], %s337
          %340 = dma.done %s335, 128
        $region56: #{tpu_custom_call.1} parent=51 // pred_fallthru
          _
      $region52: #{tpu_custom_call.1} parent=5 // pred_fallthru
        _
    $region6: #{tpu_custom_call.1} parent=1 // loop_footer
      %s20 = sadd.s32 1, %s16
    $region7: #{tpu_custom_call.1} parent=1 // loop_footer_branch
      %15 = sbr.rel target = $region3
    $region8: #{tpu_custom_call.1} parent=1 // loop_exit
      _
    %341 = vsyncpa [#allocation4], 1
    %s342 = scalar_lea.sflag [#allocation4], 1
    %343 = vsyncpa %s342, 1
    %344 = vsyncpa [#allocation7], 1
    %345 = vsyncpa [#allocation5], 1
    %s346 = scalar_lea.sflag [#allocation5], 1
    %347 = vsyncpa %s346, 1

</llo_original>
